<compile_context>
chip_gen: v6e
topology: v6e:2x2x1
jax: 0.10.0
libtpu: 0.0.40
codegen_flags: <defaults>
</compile_context>

<pallas_src>
import jax
import jax.numpy as jnp
from jax.experimental import pallas as pl
from jax.experimental.pallas import tpu as pltpu


LAYER_SIZES = (10, 64, 32, 16, 1)


# ----------------------------------------------------------------------------
# Fused 4-layer MLP kernel, batch-on-lanes: Linear+ReLU x3 -> Linear
#   x_ref : (10, tb)          w{l}_ref : (out_l, in_l)     b{l}_ref : (out_l, 1)
#   o_ref : (1, tb)
# ----------------------------------------------------------------------------
def _mlp_kernel(x_ref, w1_ref, b1_ref, w2_ref, b2_ref, w3_ref, b3_ref,
                w4_ref, b4_ref, o_ref):
    h = jnp.dot(w1_ref[...], x_ref[...], preferred_element_type=jnp.float32)
    h = jnp.maximum(h + b1_ref[...], 0.0)                      # (64, tb)
    h = jnp.dot(w2_ref[...], h, preferred_element_type=jnp.float32)
    h = jnp.maximum(h + b2_ref[...], 0.0)                      # (32, tb)
    h = jnp.dot(w3_ref[...], h, preferred_element_type=jnp.float32)
    h = jnp.maximum(h + b3_ref[...], 0.0)                      # (16, tb)
    h = jnp.dot(w4_ref[...], h, preferred_element_type=jnp.float32)
    o_ref[...] = (h + b4_ref[...]).astype(o_ref.dtype)         # (1, tb)


def _round_up(x, m):
    return ((x + m - 1) // m) * m


def age_regressor_forward(params, x):
    """x: (B, 10) float32 -> (B, 1) float32."""
    B, D = x.shape
    assert D == LAYER_SIZES[0], (B, D)

    # Batch maps to lanes, so the tile must be a multiple of 128.
    # Large tiles amortize per-grid-step overhead; keep >= 2 grid steps when
    # the batch allows it so v7x's two TensorCores both get work.
    b128 = _round_up(B, 128)
    if b128 <= 128:
        tb = b128
    else:
        tb = min(2048, _round_up(b128 // 2, 128))
    Bp = _round_up(B, tb)

    # (B, 10) -> (10, Bp): features on sublanes, batch on lanes.
    xt = x.astype(jnp.float32).T
    if Bp != B:
        xt = jnp.pad(xt, ((0, 0), (0, Bp - B)))

    operands = [xt]
    in_specs = [pl.BlockSpec((LAYER_SIZES[0], tb), lambda i: (0, i))]
    for layer in range(1, 5):
        w = params[f"w{layer}"].astype(jnp.float32)             # (out, in)
        b = params[f"b{layer}"].reshape(-1, 1).astype(jnp.float32)  # (out, 1)
        operands += [w, b]
        # Full-array blocks with constant index maps: VMEM-resident all run.
        in_specs.append(pl.BlockSpec(w.shape, lambda i: (0, 0)))
        in_specs.append(pl.BlockSpec(b.shape, lambda i: (0, 0)))

    out = pl.pallas_call(
        _mlp_kernel,
        out_shape=jax.ShapeDtypeStruct((1, Bp), jnp.float32),
        grid=(Bp // tb,),
        in_specs=in_specs,
        out_specs=pl.BlockSpec((1, tb), lambda i: (0, i)),
        compiler_params=pltpu.CompilerParams(
            dimension_semantics=("parallel",)),
    )(*operands)

    # (1, Bp) lane-dense result -> (B, 1) like the PyTorch module.
    return out[0, :B].reshape(B, 1)


# ----------------------------------------------------------------------------
# Parameters (PyTorch-default-style uniform init), weights stored as (out, in)
# exactly like nn.Linear.
# ----------------------------------------------------------------------------
def init_age_regressor_params(key):
    params = {}
    keys = jax.random.split(key, 2 * (len(LAYER_SIZES) - 1))
    for idx in range(len(LAYER_SIZES) - 1):
        fan_in, fan_out = LAYER_SIZES[idx], LAYER_SIZES[idx + 1]
        bound = 1.0 / (fan_in ** 0.5)
        params[f"w{idx + 1}"] = jax.random.uniform(
            keys[2 * idx], (fan_out, fan_in), jnp.float32, -bound, bound)
        params[f"b{idx + 1}"] = jax.random.uniform(
            keys[2 * idx + 1], (fan_out,), jnp.float32, -bound, bound)
    return params


# ----------------------------------------------------------------------------
# Pure-JAX f32 reference (same math as the PyTorch module)
# ----------------------------------------------------------------------------
def reference_forward(params, x):
    h = x.astype(jnp.float32)
    for layer in range(1, 5):
        w = params[f"w{layer}"]                                  # (out, in)
        b = params[f"b{layer}"]
        h = jnp.dot(h, w.T) + b
        if layer < 4:
            h = jnp.maximum(h, 0.0)
    return h


if __name__ == "__main__":
    key = jax.random.PRNGKey(0)
    kp, kx = jax.random.split(key)
    params = init_age_regressor_params(kp)

    B = 2
    x = jax.random.normal(kx, (B, 10), jnp.float32)

    out = age_regressor_forward(params, x)
    out = jax.block_until_ready(out)

    assert out.shape == (B, 1), out.shape
    assert bool(jnp.all(jnp.isfinite(out)))

    ref = reference_forward(params, x)
    assert bool(jnp.allclose(out, ref, rtol=1e-2, atol=1e-2)), (out, ref)

    print("KERNEL_OK")
</pallas_src>

<mosaic_0001>
module attributes {stable_mosaic.version = 11 : i64} {
  func.func @_mlp_kernel(%arg0: i32, %arg1: memref<10x128xf32, #tpu.memory_space<vmem>>, %arg2: memref<64x10xf32, #tpu.memory_space<vmem>>, %arg3: memref<64x1xf32, #tpu.memory_space<vmem>>, %arg4: memref<32x64xf32, #tpu.memory_space<vmem>>, %arg5: memref<32x1xf32, #tpu.memory_space<vmem>>, %arg6: memref<16x32xf32, #tpu.memory_space<vmem>>, %arg7: memref<16x1xf32, #tpu.memory_space<vmem>>, %arg8: memref<1x16xf32, #tpu.memory_space<vmem>>, %arg9: memref<1x1xf32, #tpu.memory_space<vmem>>, %arg10: memref<1x128xf32, #tpu.memory_space<vmem>>) attributes {dimension_semantics = [#tpu.dimension_semantics<parallel>], iteration_bounds = array<i64: 1>, scalar_prefetch = 0 : i64, scratch_operands = 0 : i64, tpu.core_type = #tpu.core_type<tc>, window_params = [{transform_indices = @transform_0, window_bounds = array<i64: 10, 128>}, {pipeline_mode = #tpu.pipeline_mode<synchronous>, transform_indices = @transform_1, window_bounds = array<i64: 64, 10>}, {pipeline_mode = #tpu.pipeline_mode<synchronous>, transform_indices = @transform_2, window_bounds = array<i64: 64, 1>}, {pipeline_mode = #tpu.pipeline_mode<synchronous>, transform_indices = @transform_3, window_bounds = array<i64: 32, 64>}, {pipeline_mode = #tpu.pipeline_mode<synchronous>, transform_indices = @transform_4, window_bounds = array<i64: 32, 1>}, {pipeline_mode = #tpu.pipeline_mode<synchronous>, transform_indices = @transform_5, window_bounds = array<i64: 16, 32>}, {pipeline_mode = #tpu.pipeline_mode<synchronous>, transform_indices = @transform_6, window_bounds = array<i64: 16, 1>}, {pipeline_mode = #tpu.pipeline_mode<synchronous>, transform_indices = @transform_7, window_bounds = array<i64: 1, 16>}, {pipeline_mode = #tpu.pipeline_mode<synchronous>, transform_indices = @transform_8, window_bounds = array<i64: 1, 1>}, {transform_indices = @transform_9, window_bounds = array<i64: 1, 128>}]} {
    %c0 = arith.constant 0 : index
    %c0_0 = arith.constant 0 : index
    %0 = vector.load %arg2[%c0, %c0_0] : memref<64x10xf32, #tpu.memory_space<vmem>>, vector<64x10xf32>
    %c0_1 = arith.constant 0 : index
    %c0_2 = arith.constant 0 : index
    %1 = vector.load %arg1[%c0_1, %c0_2] : memref<10x128xf32, #tpu.memory_space<vmem>>, vector<10x128xf32>
    %cst = arith.constant dense<0.000000e+00> : vector<64x128xf32>
    %2 = tpu.matmul %0, %1, %cst {dimension_numbers = #tpu.dot_dimension_numbers<[1], [0], [0], [1], [0, 0, 1, 1], [], []>} : vector<64x10xf32>, vector<10x128xf32>, vector<64x128xf32> -> vector<64x128xf32>
    %c0_3 = arith.constant 0 : index
    %c0_4 = arith.constant 0 : index
    %3 = vector.load %arg3[%c0_3, %c0_4] : memref<64x1xf32, #tpu.memory_space<vmem>>, vector<64x1xf32>
    %4 = vector.broadcast %3 : vector<64x1xf32> to vector<64x128xf32>
    %5 = arith.addf %2, %4 : vector<64x128xf32>
    %cst_5 = arith.constant 0.000000e+00 : f32
    %6 = vector.broadcast %cst_5 : f32 to vector<64x128xf32>
    %7 = arith.maximumf %5, %6 : vector<64x128xf32>
    %c0_6 = arith.constant 0 : index
    %c0_7 = arith.constant 0 : index
    %8 = vector.load %arg4[%c0_6, %c0_7] : memref<32x64xf32, #tpu.memory_space<vmem>>, vector<32x64xf32>
    %cst_8 = arith.constant dense<0.000000e+00> : vector<32x128xf32>
    %9 = tpu.matmul %8, %7, %cst_8 {dimension_numbers = #tpu.dot_dimension_numbers<[1], [0], [0], [1], [0, 0, 1, 1], [], []>} : vector<32x64xf32>, vector<64x128xf32>, vector<32x128xf32> -> vector<32x128xf32>
    %c0_9 = arith.constant 0 : index
    %c0_10 = arith.constant 0 : index
    %10 = vector.load %arg5[%c0_9, %c0_10] : memref<32x1xf32, #tpu.memory_space<vmem>>, vector<32x1xf32>
    %11 = vector.broadcast %10 : vector<32x1xf32> to vector<32x128xf32>
    %12 = arith.addf %9, %11 : vector<32x128xf32>
    %cst_11 = arith.constant 0.000000e+00 : f32
    %13 = vector.broadcast %cst_11 : f32 to vector<32x128xf32>
    %14 = arith.maximumf %12, %13 : vector<32x128xf32>
    %c0_12 = arith.constant 0 : index
    %c0_13 = arith.constant 0 : index
    %15 = vector.load %arg6[%c0_12, %c0_13] : memref<16x32xf32, #tpu.memory_space<vmem>>, vector<16x32xf32>
    %cst_14 = arith.constant dense<0.000000e+00> : vector<16x128xf32>
    %16 = tpu.matmul %15, %14, %cst_14 {dimension_numbers = #tpu.dot_dimension_numbers<[1], [0], [0], [1], [0, 0, 1, 1], [], []>} : vector<16x32xf32>, vector<32x128xf32>, vector<16x128xf32> -> vector<16x128xf32>
    %c0_15 = arith.constant 0 : index
    %c0_16 = arith.constant 0 : index
    %17 = vector.load %arg7[%c0_15, %c0_16] : memref<16x1xf32, #tpu.memory_space<vmem>>, vector<16x1xf32>
    %18 = vector.broadcast %17 : vector<16x1xf32> to vector<16x128xf32>
    %19 = arith.addf %16, %18 : vector<16x128xf32>
    %cst_17 = arith.constant 0.000000e+00 : f32
    %20 = vector.broadcast %cst_17 : f32 to vector<16x128xf32>
    %21 = arith.maximumf %19, %20 : vector<16x128xf32>
    %c0_18 = arith.constant 0 : index
    %c0_19 = arith.constant 0 : index
    %22 = vector.load %arg8[%c0_18, %c0_19] : memref<1x16xf32, #tpu.memory_space<vmem>>, vector<1x16xf32>
    %cst_20 = arith.constant dense<0.000000e+00> : vector<1x128xf32>
    %23 = tpu.matmul %22, %21, %cst_20 {dimension_numbers = #tpu.dot_dimension_numbers<[1], [0], [0], [1], [0, 0, 1, 1], [], []>} : vector<1x16xf32>, vector<16x128xf32>, vector<1x128xf32> -> vector<1x128xf32>
    %c0_21 = arith.constant 0 : index
    %c0_22 = arith.constant 0 : index
    %24 = vector.load %arg9[%c0_21, %c0_22] : memref<1x1xf32, #tpu.memory_space<vmem>>, vector<1x1xf32>
    %25 = vector.broadcast %24 : vector<1x1xf32> to vector<1x128xf32>
    %26 = arith.addf %23, %25 : vector<1x128xf32>
    %c0_23 = arith.constant 0 : index
    %c0_24 = arith.constant 0 : index
    %27 = vector.load %arg10[%c0_23, %c0_24] : memref<1x128xf32, #tpu.memory_space<vmem>>, vector<1x128xf32>
    tpu.vector_store %arg10[%c0_23, %c0_24], %26 {strides = array<i32>} : memref<1x128xf32, #tpu.memory_space<vmem>>, vector<1x128xf32>,
    return
  }
  func.func @transform_0(%arg0: i32) -> (i32, i32) {
    %c0_i32 = arith.constant 0 : i32
    %c0_i32_0 = arith.constant 0 : i32
    return %c0_i32, %arg0 : i32, i32
  }
  func.func @transform_1(%arg0: i32) -> (i32, i32) {
    %c0_i32 = arith.constant 0 : i32
    %c0_i32_0 = arith.constant 0 : i32
    %c0_i32_1 = arith.constant 0 : i32
    return %c0_i32, %c0_i32_0 : i32, i32
  }
  func.func @transform_2(%arg0: i32) -> (i32, i32) {
    %c0_i32 = arith.constant 0 : i32
    %c0_i32_0 = arith.constant 0 : i32
    %c0_i32_1 = arith.constant 0 : i32
    return %c0_i32, %c0_i32_0 : i32, i32
  }
  func.func @transform_3(%arg0: i32) -> (i32, i32) {
    %c0_i32 = arith.constant 0 : i32
    %c0_i32_0 = arith.constant 0 : i32
    %c0_i32_1 = arith.constant 0 : i32
    return %c0_i32, %c0_i32_0 : i32, i32
  }
  func.func @transform_4(%arg0: i32) -> (i32, i32) {
    %c0_i32 = arith.constant 0 : i32
    %c0_i32_0 = arith.constant 0 : i32
    %c0_i32_1 = arith.constant 0 : i32
    return %c0_i32, %c0_i32_0 : i32, i32
  }
  func.func @transform_5(%arg0: i32) -> (i32, i32) {
    %c0_i32 = arith.constant 0 : i32
    %c0_i32_0 = arith.constant 0 : i32
    %c0_i32_1 = arith.constant 0 : i32
    return %c0_i32, %c0_i32_0 : i32, i32
  }
  func.func @transform_6(%arg0: i32) -> (i32, i32) {
    %c0_i32 = arith.constant 0 : i32
    %c0_i32_0 = arith.constant 0 : i32
    %c0_i32_1 = arith.constant 0 : i32
    return %c0_i32, %c0_i32_0 : i32, i32
  }
  func.func @transform_7(%arg0: i32) -> (i32, i32) {
    %c0_i32 = arith.constant 0 : i32
    %c0_i32_0 = arith.constant 0 : i32
    %c0_i32_1 = arith.constant 0 : i32
    return %c0_i32, %c0_i32_0 : i32, i32
  }
  func.func @transform_8(%arg0: i32) -> (i32, i32) {
    %c0_i32 = arith.constant 0 : i32
    %c0_i32_0 = arith.constant 0 : i32
    %c0_i32_1 = arith.constant 0 : i32
    return %c0_i32, %c0_i32_0 : i32, i32
  }
  func.func @transform_9(%arg0: i32) -> (i32, i32) {
    %c0_i32 = arith.constant 0 : i32
    %c0_i32_0 = arith.constant 0 : i32
    return %c0_i32, %arg0 : i32, i32
  }
}

</mosaic_0001>

<llo_original>
// kernel: tpu_custom_call.1
$region0: #{tpu_custom_call.1}
  #allocation0 [shape = 'u32[]', space=smem, size = 0x4, offset = 0x4, fixed_abs, tag = 'smem constant byte address 0x4 - core index']
  #allocation1 [shape = 'u32[144,128]{1,0:T(1,128)}', space=vmem, size = 0x12000, scoped, tag = 'internal scratch']
  #allocation2 [shape = 'f32[1,1]{1,0:T(1,128)S(1)}', space=vmem, size = 0x200, scoped, tag = 'scoped memory for tpu_custom_call.1']
  %s0 = inlined_call_operand.vmem [shape: f32[10,128], index: 0, kind: input, shape index: {}]
  %s1 = inlined_call_operand.vmem [shape: f32[64,10], index: 1, kind: input, shape index: {}]
  %s2 = inlined_call_operand.vmem [shape: f32[64,1], index: 2, kind: input, shape index: {}]
  %s3 = inlined_call_operand.vmem [shape: f32[32,64], index: 3, kind: input, shape index: {}]
  %s4 = inlined_call_operand.vmem [shape: f32[32,1], index: 4, kind: input, shape index: {}]
  %s5 = inlined_call_operand.vmem [shape: f32[16,32], index: 5, kind: input, shape index: {}]
  %s6 = inlined_call_operand.vmem [shape: f32[16,1], index: 6, kind: input, shape index: {}]
  %s7 = inlined_call_operand.vmem [shape: f32[1,16], index: 7, kind: input, shape index: {}]
  %s8 = inlined_call_operand.<no memory space> [shape: f32[1,1], index: 8, kind: input, shape index: {}]
  %s9 = inlined_call_operand.hbm [shape: f32[1,128], index: 9, kind: output, shape index: {}]
  %s10 = sld [smem:[#allocation0]]
  $region46: #{tpu_custom_call.1} parent=0
    _
  %s12 = ssub.s32 1, %s10
  %s13 = scalar_select 0, %s12, %s10
  %v14 = vstv %s8
  %15 = vst [vmem:[#allocation2] sm:$0x1] %v14
  $region1: #{tpu_custom_call.1} parent=0
    #allocation3 [shape = 'u8[512]{0}', space=vmem, size = 0x400, scoped, tag = 'output window, operand 0, single buffered']
    #allocation4 [shape = 's32[1]{0}', space=sflag, size = 0x4, scoped, tag = 'scoped memory for tpu_custom_call.1']
    %16 = vsyncpa [#allocation4], 0
    // Predicated region
    $region2: #{tpu_custom_call.1} parent=1 // pred_check
      _
    $region3: #{tpu_custom_call.1} parent=1 // pred_check_branch
      %18 = sbr.rel (0) target = $region5
    $region4: #{tpu_custom_call.1} parent=1 // pred_region
      _
    $region5: #{tpu_custom_call.1} parent=1 // pred_fallthru
      _
    // Predicated region
    $region6: #{tpu_custom_call.1} parent=1 // pred_check
      _
    $region7: #{tpu_custom_call.1} parent=1 // pred_check_branch
      %20 = sbr.rel (0) target = $region9
    $region8: #{tpu_custom_call.1} parent=1 // pred_region
      _
    $region9: #{tpu_custom_call.1} parent=1 // pred_fallthru
      _
    // Predicated region
    $region10: #{tpu_custom_call.1} parent=1 // pred_check
      _
    $region11: #{tpu_custom_call.1} parent=1 // pred_check_branch
      %22 = sbr.rel (0) target = $region13
    $region12: #{tpu_custom_call.1} parent=1 // pred_region
      _
    $region13: #{tpu_custom_call.1} parent=1 // pred_fallthru
      _
    // Predicated region
    $region14: #{tpu_custom_call.1} parent=1 // pred_check
      _
    $region15: #{tpu_custom_call.1} parent=1 // pred_check_branch
      %24 = sbr.rel (0) target = $region17
    $region16: #{tpu_custom_call.1} parent=1 // pred_region
      _
    $region17: #{tpu_custom_call.1} parent=1 // pred_fallthru
      _
    // Predicated region
    $region18: #{tpu_custom_call.1} parent=1 // pred_check
      _
    $region19: #{tpu_custom_call.1} parent=1 // pred_check_branch
      %26 = sbr.rel (0) target = $region21
    $region20: #{tpu_custom_call.1} parent=1 // pred_region
      _
    $region21: #{tpu_custom_call.1} parent=1 // pred_fallthru
      _
    // Predicated region
    $region22: #{tpu_custom_call.1} parent=1 // pred_check
      _
    $region23: #{tpu_custom_call.1} parent=1 // pred_check_branch
      %28 = sbr.rel (0) target = $region25
    $region24: #{tpu_custom_call.1} parent=1 // pred_region
      _
    $region25: #{tpu_custom_call.1} parent=1 // pred_fallthru
      _
    // Predicated region
    $region26: #{tpu_custom_call.1} parent=1 // pred_check
      _
    $region27: #{tpu_custom_call.1} parent=1 // pred_check_branch
      %30 = sbr.rel (0) target = $region29
    $region28: #{tpu_custom_call.1} parent=1 // pred_region
      _
    $region29: #{tpu_custom_call.1} parent=1 // pred_fallthru
      _
    // Predicated region
    $region30: #{tpu_custom_call.1} parent=1 // pred_check
      _
    $region31: #{tpu_custom_call.1} parent=1 // pred_check_branch
      %32 = sbr.rel (0) target = $region33
    $region32: #{tpu_custom_call.1} parent=1 // pred_region
      _
    $region33: #{tpu_custom_call.1} parent=1 // pred_fallthru
      _
    // Predicated region
    $region34: #{tpu_custom_call.1} parent=1 // pred_check
      _
    $region35: #{tpu_custom_call.1} parent=1 // pred_check_branch
      %34 = sbr.rel (0) target = $region37
    $region36: #{tpu_custom_call.1} parent=1 // pred_region
      _
    $region37: #{tpu_custom_call.1} parent=1 // pred_fallthru
      _
    %v35 = vld [vmem:[%s1] sm:$0xff]
    %v36 = vld [vmem:[%s1 + $0x8] sm:$0xff]
    %v37 = vld [vmem:[%s1 + $0x10] sm:$0xff]
    %v38 = vld [vmem:[%s1 + $0x18] sm:$0xff]
    %v39 = vld [vmem:[%s1 + $0x20] sm:$0xff]
    %v40 = vld [vmem:[%s1 + $0x28] sm:$0xff]
    %v41 = vld [vmem:[%s1 + $0x30] sm:$0xff]
    %v42 = vld [vmem:[%s1 + $0x38] sm:$0xff]
    %v43 = vld [vmem:[%s0] sm:$0xff]
    %v44 = vld [vmem:[%s0 + $0x8] sm:$0x3]
    %v45 = vld [vmem:[%s2] sm:$0xff]
    %v46 = vld [vmem:[%s2 + $0x8] sm:$0xff]
    %v47 = vld [vmem:[%s2 + $0x10] sm:$0xff]
    %v48 = vld [vmem:[%s2 + $0x18] sm:$0xff]
    %v49 = vld [vmem:[%s2 + $0x20] sm:$0xff]
    %v50 = vld [vmem:[%s2 + $0x28] sm:$0xff]
    %v51 = vld [vmem:[%s2 + $0x30] sm:$0xff]
    %v52 = vld [vmem:[%s2 + $0x38] sm:$0xff]
    %54 = vset.pattern.permute.xlu0 0
    %55 = vperm.xlu0 %54, %v45
    %v56 = vpop.permute.xlu0 %55
    %59 = vset.pattern.permute.xlu0 0
    %60 = vperm.xlu0 %59, %v46
    %v61 = vpop.permute.xlu0 %60
    %64 = vset.pattern.permute.xlu0 0
    %65 = vperm.xlu0 %64, %v47
    %v66 = vpop.permute.xlu0 %65
    %69 = vset.pattern.permute.xlu0 0
    %70 = vperm.xlu0 %69, %v48
    %v71 = vpop.permute.xlu0 %70
    %74 = vset.pattern.permute.xlu0 0
    %75 = vperm.xlu0 %74, %v49
    %v76 = vpop.permute.xlu0 %75
    %79 = vset.pattern.permute.xlu0 0
    %80 = vperm.xlu0 %79, %v50
    %v81 = vpop.permute.xlu0 %80
    %84 = vset.pattern.permute.xlu0 0
    %85 = vperm.xlu0 %84, %v51
    %v86 = vpop.permute.xlu0 %85
    %89 = vset.pattern.permute.xlu0 0
    %90 = vperm.xlu0 %89, %v52
    %v91 = vpop.permute.xlu0 %90
    %vm93 = vcmask 80896
    %v95 = vsel %vm93, %v35, 0
    %v98 = vsel %vm93, %v36, 0
    %v101 = vsel %vm93, %v37, 0
    %v104 = vsel %vm93, %v38, 0
    %v107 = vsel %vm93, %v39, 0
    %v110 = vsel %vm93, %v40, 0
    %v113 = vsel %vm93, %v41, 0
    %v116 = vsel %vm93, %v42, 0
    %vm118 = vcmask 1041408
    %v120 = vsel %vm118, %v44, 0
    %122 = vmatprep.subr.mxu0 0.0
    %123 = vmatpush1.msra.mxu0 0.0
    %124 = vmatprep.subr.mxu0 0.0
    %125 = vmatpush1.msra.mxu0 0.0
    %126 = vmatprep.subr.mxu0 0.0
    %127 = vmatpush1.msra.mxu0 0.0
    %128 = vmatprep.subr.mxu0 0.0
    %129 = vmatpush1.msra.mxu0 0.0
    %130 = vmatprep.subr.mxu0 0.0
    %131 = vmatpush1.msra.mxu0 0.0
    %132 = vmatprep.subr.mxu0 0.0
    %133 = vmatpush1.msra.mxu0 0.0
    %134 = vmatprep.subr.mxu0 0.0
    %135 = vmatpush1.msra.mxu0 0.0
    %136 = vmatprep.subr.mxu0 0.0
    %137 = vmatpush1.msra.mxu0 0.0
    %138 = vmatprep.subr.mxu0 0.0
    %139 = vmatpush1.msra.mxu0 0.0
    %140 = vmatprep.subr.mxu0 0.0
    %141 = vmatpush1.msra.mxu0 0.0
    %142 = vmatprep.subr.mxu0 0.0
    %143 = vmatpush1.msra.mxu0 0.0
    %144 = vmatprep.subr.mxu0 0.0
    %145 = vmatpush1.msra.mxu0 0.0
    %146 = vmatprep.subr.mxu0 0.0
    %147 = vmatpush1.msra.mxu0 0.0
    %148 = vmatprep.subr.mxu0 0.0
    %149 = vmatpush1.msra.mxu0 0.0
    %150 = vmatprep.subr.mxu0 0.0
    %151 = vmatpush1.msra.mxu0 %v120
    %152 = vmatprep.subr.mxu0 0.0
    %153 = vmatpush1.msra.mxu0 %v43
    %154 = vmatprep.subr.mxu0 0.0
    %155 = vmatpush2.msra.mxu0 0.0
    %156 = vmatprep.subr.mxu0 0.0
    %157 = vmatpush2.msra.mxu0 0.0
    %158 = vmatprep.subr.mxu0 0.0
    %159 = vmatpush2.msra.mxu0 0.0
    %160 = vmatprep.subr.mxu0 0.0
    %161 = vmatpush2.msra.mxu0 0.0
    %162 = vmatprep.subr.mxu0 0.0
    %163 = vmatpush2.msra.mxu0 0.0
    %164 = vmatprep.subr.mxu0 0.0
    %165 = vmatpush2.msra.mxu0 0.0
    %166 = vmatprep.subr.mxu0 0.0
    %167 = vmatpush2.msra.mxu0 0.0
    %168 = vmatprep.subr.mxu0 0.0
    %169 = vmatpush2.msra.mxu0 0.0
    %170 = vmatprep.subr.mxu0 0.0
    %171 = vmatpush2.msra.mxu0 0.0
    %172 = vmatprep.subr.mxu0 0.0
    %173 = vmatpush2.msra.mxu0 0.0
    %174 = vmatprep.subr.mxu0 0.0
    %175 = vmatpush2.msra.mxu0 0.0
    %176 = vmatprep.subr.mxu0 0.0
    %177 = vmatpush2.msra.mxu0 0.0
    %178 = vmatprep.subr.mxu0 0.0
    %179 = vmatpush2.msra.mxu0 0.0
    %180 = vmatprep.subr.mxu0 0.0
    %181 = vmatpush2.msra.mxu0 0.0
    %182 = vmatprep.subr.mxu0 0.0
    %183 = vmatpush2.msra.mxu0 0.0
    %184 = vmatprep.subr.mxu0 0.0
    %185 = vmatpush2.msra.mxu0 0.0
    %186 = vmatprep.mubr.f32.mxu0 0.0
    %187 = vmatmul.mubr.f32.gmra.mxu0 %v95
    %v188 = vpop.f32.mrf.mxu0
    %v189 = vadd.f32 %v56, %v188
    %v190 = vpop.f32.mrf.mxu0
    %191 = vmatprep.mubr.f32.mxu0 0.0
    %192 = vmatmul.mubr.f32.gmra.mxu0 %v98
    %v193 = vpop.f32.mrf.mxu0
    %v194 = vadd.f32 %v61, %v193
    %v195 = vpop.f32.mrf.mxu0
    %196 = vmatprep.mubr.f32.mxu0 0.0
    %197 = vmatmul.mubr.f32.gmra.mxu0 %v101
    %v198 = vpop.f32.mrf.mxu0
    %v199 = vadd.f32 %v66, %v198
    %v200 = vpop.f32.mrf.mxu0
    %201 = vmatprep.mubr.f32.mxu0 0.0
    %202 = vmatmul.mubr.f32.gmra.mxu0 %v104
    %v203 = vpop.f32.mrf.mxu0
    %v204 = vadd.f32 %v71, %v203
    %v205 = vpop.f32.mrf.mxu0
    %206 = vmatprep.mubr.f32.mxu0 0.0
    %207 = vmatmul.mubr.f32.gmra.mxu0 %v107
    %v208 = vpop.f32.mrf.mxu0
    %v209 = vadd.f32 %v76, %v208
    %v210 = vpop.f32.mrf.mxu0
    %211 = vmatprep.mubr.f32.mxu0 0.0
    %212 = vmatmul.mubr.f32.gmra.mxu0 %v110
    %v213 = vpop.f32.mrf.mxu0
    %v214 = vadd.f32 %v81, %v213
    %v215 = vpop.f32.mrf.mxu0
    %216 = vmatprep.mubr.f32.mxu0 0.0
    %217 = vmatmul.mubr.f32.gmra.mxu0 %v113
    %v218 = vpop.f32.mrf.mxu0
    %v219 = vadd.f32 %v86, %v218
    %v220 = vpop.f32.mrf.mxu0
    %221 = vmatprep.mubr.f32.mxu0 0.0
    %222 = vmatmul.mubr.f32.gmra.mxu0 %v116
    %v223 = vpop.f32.mrf.mxu0
    %v224 = vadd.f32 %v91, %v223
    %v225 = vpop.f32.mrf.mxu0
    %226 = vdwg.mxu0
    %v227 = vmax.f32 %v189, 0.0
    %v228 = vmax.f32 %v194, 0.0
    %v229 = vmax.f32 %v199, 0.0
    %v230 = vmax.f32 %v204, 0.0
    %v231 = vmax.f32 %v209, 0.0
    %v232 = vmax.f32 %v214, 0.0
    %v233 = vmax.f32 %v219, 0.0
    %v234 = vmax.f32 %v224, 0.0
    %v235 = vld [vmem:[%s3] sm:$0xff]
    %v236 = vld [vmem:[%s3 + $0x8] sm:$0xff]
    %v237 = vld [vmem:[%s3 + $0x10] sm:$0xff]
    %v238 = vld [vmem:[%s3 + $0x18] sm:$0xff]
    %v239 = vld [vmem:[%s4] sm:$0xff]
    %v240 = vld [vmem:[%s4 + $0x8] sm:$0xff]
    %v241 = vld [vmem:[%s4 + $0x10] sm:$0xff]
    %v242 = vld [vmem:[%s4 + $0x18] sm:$0xff]
    %244 = vset.pattern.permute.xlu0 0
    %245 = vperm.xlu0 %244, %v239
    %v246 = vpop.permute.xlu0 %245
    %249 = vset.pattern.permute.xlu0 0
    %250 = vperm.xlu0 %249, %v240
    %v251 = vpop.permute.xlu0 %250
    %254 = vset.pattern.permute.xlu0 0
    %255 = vperm.xlu0 %254, %v241
    %v256 = vpop.permute.xlu0 %255
    %259 = vset.pattern.permute.xlu0 0
    %260 = vperm.xlu0 %259, %v242
    %v261 = vpop.permute.xlu0 %260
    %vm263 = vcmask 523264
    %v265 = vsel %vm263, %v235, 0
    %v268 = vsel %vm263, %v236, 0
    %v271 = vsel %vm263, %v237, 0
    %v274 = vsel %vm263, %v238, 0
    %276 = vmatprep.subr.mxu0 0.0
    %277 = vmatpush1.msra.mxu0 0.0
    %278 = vmatprep.subr.mxu0 0.0
    %279 = vmatpush1.msra.mxu0 0.0
    %280 = vmatprep.subr.mxu0 0.0
    %281 = vmatpush1.msra.mxu0 0.0
    %282 = vmatprep.subr.mxu0 0.0
    %283 = vmatpush1.msra.mxu0 0.0
    %284 = vmatprep.subr.mxu0 0.0
    %285 = vmatpush1.msra.mxu0 0.0
    %286 = vmatprep.subr.mxu0 0.0
    %287 = vmatpush1.msra.mxu0 0.0
    %288 = vmatprep.subr.mxu0 0.0
    %289 = vmatpush1.msra.mxu0 0.0
    %290 = vmatprep.subr.mxu0 0.0
    %291 = vmatpush1.msra.mxu0 0.0
    %292 = vmatprep.subr.mxu0 0.0
    %293 = vmatpush1.msra.mxu0 %v234
    %294 = vmatprep.subr.mxu0 0.0
    %295 = vmatpush1.msra.mxu0 %v233
    %296 = vmatprep.subr.mxu0 0.0
    %297 = vmatpush1.msra.mxu0 %v232
    %298 = vmatprep.subr.mxu0 0.0
    %299 = vmatpush1.msra.mxu0 %v231
    %300 = vmatprep.subr.mxu0 0.0
    %301 = vmatpush1.msra.mxu0 %v230
    %302 = vmatprep.subr.mxu0 0.0
    %303 = vmatpush1.msra.mxu0 %v229
    %304 = vmatprep.subr.mxu0 0.0
    %305 = vmatpush1.msra.mxu0 %v228
    %306 = vmatprep.subr.mxu0 0.0
    %307 = vmatpush1.msra.mxu0 %v227
    %308 = vmatprep.subr.mxu0 0.0
    %309 = vmatpush2.msra.mxu0 0.0
    %310 = vmatprep.subr.mxu0 0.0
    %311 = vmatpush2.msra.mxu0 0.0
    %312 = vmatprep.subr.mxu0 0.0
    %313 = vmatpush2.msra.mxu0 0.0
    %314 = vmatprep.subr.mxu0 0.0
    %315 = vmatpush2.msra.mxu0 0.0
    %316 = vmatprep.subr.mxu0 0.0
    %317 = vmatpush2.msra.mxu0 0.0
    %318 = vmatprep.subr.mxu0 0.0
    %319 = vmatpush2.msra.mxu0 0.0
    %320 = vmatprep.subr.mxu0 0.0
    %321 = vmatpush2.msra.mxu0 0.0
    %322 = vmatprep.subr.mxu0 0.0
    %323 = vmatpush2.msra.mxu0 0.0
    %324 = vmatprep.subr.mxu0 0.0
    %325 = vmatpush2.msra.mxu0 0.0
    %326 = vmatprep.subr.mxu0 0.0
    %327 = vmatpush2.msra.mxu0 0.0
    %328 = vmatprep.subr.mxu0 0.0
    %329 = vmatpush2.msra.mxu0 0.0
    %330 = vmatprep.subr.mxu0 0.0
    %331 = vmatpush2.msra.mxu0 0.0
    %332 = vmatprep.subr.mxu0 0.0
    %333 = vmatpush2.msra.mxu0 0.0
    %334 = vmatprep.subr.mxu0 0.0
    %335 = vmatpush2.msra.mxu0 0.0
    %336 = vmatprep.subr.mxu0 0.0
    %337 = vmatpush2.msra.mxu0 0.0
    %338 = vmatprep.subr.mxu0 0.0
    %339 = vmatpush2.msra.mxu0 0.0
    %340 = vmatprep.mubr.f32.mxu0 0.0
    %341 = vmatmul.mubr.f32.gmra.mxu0 %v265
    %v342 = vpop.f32.mrf.mxu0
    %v343 = vadd.f32 %v246, %v342
    %v344 = vpop.f32.mrf.mxu0
    %345 = vmatprep.mubr.f32.mxu0 0.0
    %346 = vmatmul.mubr.f32.gmra.mxu0 %v268
    %v347 = vpop.f32.mrf.mxu0
    %v348 = vadd.f32 %v251, %v347
    %v349 = vpop.f32.mrf.mxu0
    %350 = vmatprep.mubr.f32.mxu0 0.0
    %351 = vmatmul.mubr.f32.gmra.mxu0 %v271
    %v352 = vpop.f32.mrf.mxu0
    %v353 = vadd.f32 %v256, %v352
    %v354 = vpop.f32.mrf.mxu0
    %355 = vmatprep.mubr.f32.mxu0 0.0
    %356 = vmatmul.mubr.f32.gmra.mxu0 %v274
    %v357 = vpop.f32.mrf.mxu0
    %v358 = vadd.f32 %v261, %v357
    %v359 = vpop.f32.mrf.mxu0
    %360 = vdwg.mxu0
    %v361 = vmax.f32 %v343, 0.0
    %v362 = vmax.f32 %v348, 0.0
    %v363 = vmax.f32 %v353, 0.0
    %v364 = vmax.f32 %v358, 0.0
    %v365 = vld [vmem:[%s5] sm:$0xff]
    %v366 = vld [vmem:[%s5 + $0x8] sm:$0xff]
    %v367 = vld [vmem:[%s6] sm:$0xff]
    %v368 = vld [vmem:[%s6 + $0x8] sm:$0xff]
    %370 = vset.pattern.permute.xlu0 0
    %371 = vperm.xlu0 %370, %v367
    %v372 = vpop.permute.xlu0 %371
    %375 = vset.pattern.permute.xlu0 0
    %376 = vperm.xlu0 %375, %v368
    %v377 = vpop.permute.xlu0 %376
    %vm379 = vcmask 261120
    %v381 = vsel %vm379, %v365, 0
    %v384 = vsel %vm379, %v366, 0
    %386 = vmatprep.subr.mxu0 0.0
    %387 = vmatpush1.msra.mxu0 0.0
    %388 = vmatprep.subr.mxu0 0.0
    %389 = vmatpush1.msra.mxu0 0.0
    %390 = vmatprep.subr.mxu0 0.0
    %391 = vmatpush1.msra.mxu0 0.0
    %392 = vmatprep.subr.mxu0 0.0
    %393 = vmatpush1.msra.mxu0 0.0
    %394 = vmatprep.subr.mxu0 0.0
    %395 = vmatpush1.msra.mxu0 0.0
    %396 = vmatprep.subr.mxu0 0.0
    %397 = vmatpush1.msra.mxu0 0.0
    %398 = vmatprep.subr.mxu0 0.0
    %399 = vmatpush1.msra.mxu0 0.0
    %400 = vmatprep.subr.mxu0 0.0
    %401 = vmatpush1.msra.mxu0 0.0
    %402 = vmatprep.subr.mxu0 0.0
    %403 = vmatpush1.msra.mxu0 0.0
    %404 = vmatprep.subr.mxu0 0.0
    %405 = vmatpush1.msra.mxu0 0.0
    %406 = vmatprep.subr.mxu0 0.0
    %407 = vmatpush1.msra.mxu0 0.0
    %408 = vmatprep.subr.mxu0 0.0
    %409 = vmatpush1.msra.mxu0 0.0
    %410 = vmatprep.subr.mxu0 0.0
    %411 = vmatpush1.msra.mxu0 %v364
    %412 = vmatprep.subr.mxu0 0.0
    %413 = vmatpush1.msra.mxu0 %v363
    %414 = vmatprep.subr.mxu0 0.0
    %415 = vmatpush1.msra.mxu0 %v362
    %416 = vmatprep.subr.mxu0 0.0
    %417 = vmatpush1.msra.mxu0 %v361
    %418 = vmatprep.subr.mxu0 0.0
    %419 = vmatpush2.msra.mxu0 0.0
    %420 = vmatprep.subr.mxu0 0.0
    %421 = vmatpush2.msra.mxu0 0.0
    %422 = vmatprep.subr.mxu0 0.0
    %423 = vmatpush2.msra.mxu0 0.0
    %424 = vmatprep.subr.mxu0 0.0
    %425 = vmatpush2.msra.mxu0 0.0
    %426 = vmatprep.subr.mxu0 0.0
    %427 = vmatpush2.msra.mxu0 0.0
    %428 = vmatprep.subr.mxu0 0.0
    %429 = vmatpush2.msra.mxu0 0.0
    %430 = vmatprep.subr.mxu0 0.0
    %431 = vmatpush2.msra.mxu0 0.0
    %432 = vmatprep.subr.mxu0 0.0
    %433 = vmatpush2.msra.mxu0 0.0
    %434 = vmatprep.subr.mxu0 0.0
    %435 = vmatpush2.msra.mxu0 0.0
    %436 = vmatprep.subr.mxu0 0.0
    %437 = vmatpush2.msra.mxu0 0.0
    %438 = vmatprep.subr.mxu0 0.0
    %439 = vmatpush2.msra.mxu0 0.0
    %440 = vmatprep.subr.mxu0 0.0
    %441 = vmatpush2.msra.mxu0 0.0
    %442 = vmatprep.subr.mxu0 0.0
    %443 = vmatpush2.msra.mxu0 0.0
    %444 = vmatprep.subr.mxu0 0.0
    %445 = vmatpush2.msra.mxu0 0.0
    %446 = vmatprep.subr.mxu0 0.0
    %447 = vmatpush2.msra.mxu0 0.0
    %448 = vmatprep.subr.mxu0 0.0
    %449 = vmatpush2.msra.mxu0 0.0
    %450 = vmatprep.mubr.f32.mxu0 0.0
    %451 = vmatmul.mubr.f32.gmra.mxu0 %v381
    %v452 = vpop.f32.mrf.mxu0
    %v453 = vadd.f32 %v372, %v452
    %v454 = vpop.f32.mrf.mxu0
    %455 = vmatprep.mubr.f32.mxu0 0.0
    %456 = vmatmul.mubr.f32.gmra.mxu0 %v384
    %v457 = vpop.f32.mrf.mxu0
    %v458 = vadd.f32 %v377, %v457
    %v459 = vpop.f32.mrf.mxu0
    %460 = vdwg.mxu0
    %v461 = vmax.f32 %v453, 0.0
    %v462 = vmax.f32 %v458, 0.0
    %v463 = vld [vmem:[%s7] sm:$0x1]
    %v464 = vld [vmem:[#allocation2] sm:$0x1]
    %466 = vset.pattern.permute.xlu0 0
    %467 = vperm.xlu0 %466, %v464
    %v468 = vpop.permute.xlu0 %467
    %v470 = vlaneseq
    %v471 = vshrl.u32 %v470, 7
    %v472 = vsub.s32 0, %v471
    %v473 = vrot.slane %v468, %v472
    %vm474 = vcmask 130048
    %v476 = vsel %vm474, %v463, 0
    %478 = vmatprep.subr.mxu0 0.0
    %479 = vmatpush1.msra.mxu0 0.0
    %480 = vmatprep.subr.mxu0 0.0
    %481 = vmatpush1.msra.mxu0 0.0
    %482 = vmatprep.subr.mxu0 0.0
    %483 = vmatpush1.msra.mxu0 0.0
    %484 = vmatprep.subr.mxu0 0.0
    %485 = vmatpush1.msra.mxu0 0.0
    %486 = vmatprep.subr.mxu0 0.0
    %487 = vmatpush1.msra.mxu0 0.0
    %488 = vmatprep.subr.mxu0 0.0
    %489 = vmatpush1.msra.mxu0 0.0
    %490 = vmatprep.subr.mxu0 0.0
    %491 = vmatpush1.msra.mxu0 0.0
    %492 = vmatprep.subr.mxu0 0.0
    %493 = vmatpush1.msra.mxu0 0.0
    %494 = vmatprep.subr.mxu0 0.0
    %495 = vmatpush1.msra.mxu0 0.0
    %496 = vmatprep.subr.mxu0 0.0
    %497 = vmatpush1.msra.mxu0 0.0
    %498 = vmatprep.subr.mxu0 0.0
    %499 = vmatpush1.msra.mxu0 0.0
    %500 = vmatprep.subr.mxu0 0.0
    %501 = vmatpush1.msra.mxu0 0.0
    %502 = vmatprep.subr.mxu0 0.0
    %503 = vmatpush1.msra.mxu0 0.0
    %504 = vmatprep.subr.mxu0 0.0
    %505 = vmatpush1.msra.mxu0 0.0
    %506 = vmatprep.subr.mxu0 0.0
    %507 = vmatpush1.msra.mxu0 %v462
    %508 = vmatprep.subr.mxu0 0.0
    %509 = vmatpush1.msra.mxu0 %v461
    %510 = vmatprep.subr.mxu0 0.0
    %511 = vmatpush2.msra.mxu0 0.0
    %512 = vmatprep.subr.mxu0 0.0
    %513 = vmatpush2.msra.mxu0 0.0
    %514 = vmatprep.subr.mxu0 0.0
    %515 = vmatpush2.msra.mxu0 0.0
    %516 = vmatprep.subr.mxu0 0.0
    %517 = vmatpush2.msra.mxu0 0.0
    %518 = vmatprep.subr.mxu0 0.0
    %519 = vmatpush2.msra.mxu0 0.0
    %520 = vmatprep.subr.mxu0 0.0
    %521 = vmatpush2.msra.mxu0 0.0
    %522 = vmatprep.subr.mxu0 0.0
    %523 = vmatpush2.msra.mxu0 0.0
    %524 = vmatprep.subr.mxu0 0.0
    %525 = vmatpush2.msra.mxu0 0.0
    %526 = vmatprep.subr.mxu0 0.0
    %527 = vmatpush2.msra.mxu0 0.0
    %528 = vmatprep.subr.mxu0 0.0
    %529 = vmatpush2.msra.mxu0 0.0
    %530 = vmatprep.subr.mxu0 0.0
    %531 = vmatpush2.msra.mxu0 0.0
    %532 = vmatprep.subr.mxu0 0.0
    %533 = vmatpush2.msra.mxu0 0.0
    %534 = vmatprep.subr.mxu0 0.0
    %535 = vmatpush2.msra.mxu0 0.0
    %536 = vmatprep.subr.mxu0 0.0
    %537 = vmatpush2.msra.mxu0 0.0
    %538 = vmatprep.subr.mxu0 0.0
    %539 = vmatpush2.msra.mxu0 0.0
    %540 = vmatprep.subr.mxu0 0.0
    %541 = vmatpush2.msra.mxu0 0.0
    %542 = vmatprep.mubr.f32.mxu0 0.0
    %543 = vmatmul.mubr.f32.gmra.mxu0 %v476
    %v544 = vpop.f32.mrf.mxu0
    %v545 = vadd.f32 %v473, %v544
    %v546 = vpop.f32.mrf.mxu0
    %547 = vdwg.mxu0
    %548 = vst [vmem:[#allocation3] sm:$0x1] %v545
    // Predicated region
    $region38: #{tpu_custom_call.1} parent=1 // pred_check
      _
    $region39: #{tpu_custom_call.1} parent=1 // pred_check_branch
      %550 = sbr.rel (0) target = $region41
    $region40: #{tpu_custom_call.1} parent=1 // pred_region
      %s552 = ssub.s32 16, 16
      %553 = vsyncadd [#allocation4], %s552
      %s555 = sshll.u32 [#allocation3], 4
      %s556 = int_to_ptr.vmem [resolvable:$true] %s555
      %558 = dma.vmem_to_hbm [thread:$0]  %s556, 16, %s9, [#allocation4]
    $region41: #{tpu_custom_call.1} parent=1 // pred_fallthru
      _
    // Predicated region
    $region42: #{tpu_custom_call.1} parent=1 // pred_check
      _
    $region43: #{tpu_custom_call.1} parent=1 // pred_check_branch
      %560 = sbr.rel (0) target = $region45
    $region44: #{tpu_custom_call.1} parent=1 // pred_region
      %561 = dma.done [#allocation4], 16
    $region45: #{tpu_custom_call.1} parent=1 // pred_fallthru
      _
    %562 = vsyncpa [#allocation4], 1

</llo_original>
